<compile_context>
chip_gen: v7x
topology: tpu7x:2x2x1
jax: 0.10.0
libtpu: 0.0.40
codegen_flags: <defaults>
</compile_context>

<pallas_src>
import functools

import jax
import jax.numpy as jnp
from jax.experimental import pallas as pl
from jax.experimental.pallas import tpu as pltpu

# Below this many total bytes the module falls back to jnp.concatenate.
_MIN_PALLAS_BYTES = 512 * 1024
# DMA chunking: keep multiple descriptors in flight for large slabs.
_MAX_CHUNKS_PER_INPUT = 4
_MIN_CHUNK_BYTES = 128 * 1024


def _concat_dma_kernel(*refs, num_inputs, chunk_specs):
    """refs = (*in_hbm_refs, out_hbm_ref, dma_sems).

    Each entry of `chunk_specs` is a static tuple
    (input_idx, src_c_start, dst_c_start, c_size); its DMA copies
    in[input_idx][:, src_c_start:src_c_start+c_size, :, :] into
    out[:, dst_c_start:dst_c_start+c_size, :, :].  All offsets are static
    Python ints, so the .at[] slices are zero-cost ref views and each DMA is
    a plain strided HBM->HBM copy.  Slicing only the channel (major) dim
    keeps the (H, W) minor tiling of source and destination identical, so
    there are no lane-alignment / partial-tile penalties.  All DMAs are
    started before any wait so the copies overlap on the DMA engines.
    """
    in_refs = refs[:num_inputs]
    out_ref = refs[num_inputs]
    sems = refs[num_inputs + 1]

    copies = []
    for sem_idx, (in_idx, src_c0, dst_c0, csz) in enumerate(chunk_specs):
        src = in_refs[in_idx].at[:, src_c0:src_c0 + csz]
        dst = out_ref.at[:, dst_c0:dst_c0 + csz]
        cp = pltpu.make_async_copy(src, dst, sems.at[sem_idx])
        cp.start()
        copies.append(cp)
    # Wait only after every copy has been issued so they all overlap.
    for cp in copies:
        cp.wait()
    # TODO(synk): optionally expose the copy as a cross-call future (return
    # the DMA semaphores with memory_space=pltpu.SEMAPHORE and wait in the
    # consumer) so the concat overlaps with the surrounding convs.


def concat_channels_pallas(xs):
    """Concatenate NCHW arrays along dim=1 using raw HBM->HBM DMAs.

    Inputs/output never touch VMEM (memory_space=pl.ANY): concat has zero
    compute, so there is nothing to pipeline, and this keeps the kernel
    insensitive to v7x's smaller 64 MiB VMEM.
    """
    # Zero-channel inputs contribute nothing; never issue a zero-byte DMA.
    xs = [x for x in xs if x.shape[1] > 0]
    assert len(xs) >= 1
    if len(xs) == 1:
        # Single-input fast path: nothing to concatenate, no copy at all.
        return xs[0]

    n, _, h, w = xs[0].shape
    dtype = xs[0].dtype
    for x in xs:
        assert x.ndim == 4
        assert x.shape[0] == n and x.shape[2] == h and x.shape[3] == w
        assert x.dtype == dtype

    channel_sizes = [int(x.shape[1]) for x in xs]
    c_out = sum(channel_sizes)
    bytes_per_channel = n * h * w * dtype.itemsize
    total_bytes = c_out * bytes_per_channel

    # Static chunk table: (input_idx, src_c_start, dst_c_start, c_size).
    chunk_specs = []
    dst_off = 0
    for i, c_i in enumerate(channel_sizes):
        input_bytes = c_i * bytes_per_channel
        n_chunks = int(min(_MAX_CHUNKS_PER_INPUT, c_i,
                           max(1, input_bytes // _MIN_CHUNK_BYTES)))
        base, rem = divmod(c_i, n_chunks)
        src_off = 0
        for k in range(n_chunks):
            csz = base + (1 if k < rem else 0)
            if csz == 0:
                continue
            chunk_specs.append((i, src_off, dst_off + src_off, csz))
            src_off += csz
        dst_off += c_i

    kernel = functools.partial(
        _concat_dma_kernel,
        num_inputs=len(xs),
        chunk_specs=tuple(chunk_specs),
    )

    # TODO(synk): on v7x (2 TCs) the DMA issue could additionally be sharded
    # across both TensorCores via a trivial parallel grid; single-core issue
    # is already sufficient on v5e/v6e.
    return pl.pallas_call(
        kernel,
        out_shape=jax.ShapeDtypeStruct((n, c_out, h, w), dtype),
        # Raw HBM refs; no auto-tiling, no VMEM staging, no grid needed.
        in_specs=[pl.BlockSpec(memory_space=pl.ANY)] * len(xs),
        out_specs=pl.BlockSpec(memory_space=pl.ANY),
        scratch_shapes=[pltpu.SemaphoreType.DMA((len(chunk_specs),))],
        cost_estimate=pl.CostEstimate(
            flops=0, transcendentals=0, bytes_accessed=2 * total_bytes),
    )(*xs)


class Concat:
    """JAX/Pallas equivalent of the YOLOv8 Concat module."""

    def __init__(self, dimension=1):
        self.d = dimension

    def __call__(self, x):
        x = list(x)
        if self.d == 1 and all(xi.ndim == 4 for xi in x):
            nonzero = [xi for xi in x if xi.shape[1] > 0]
            same_meta = (
                len(nonzero) >= 1
                and all(xi.dtype == nonzero[0].dtype for xi in nonzero)
                and all(xi.shape[0] == nonzero[0].shape[0]
                        and xi.shape[2:] == nonzero[0].shape[2:]
                        for xi in nonzero)
            )
            if same_meta:
                if len(nonzero) == 1:
                    return nonzero[0]
                total_bytes = sum(int(xi.size) * xi.dtype.itemsize
                                  for xi in nonzero)
                if total_bytes >= _MIN_PALLAS_BYTES:
                    return concat_channels_pallas(nonzero)
        # TODO(synk): only the NCHW channel-dim (dim=1) concat above the size
        # threshold uses the Pallas DMA kernel; other dims/ranks and small
        # concats fall back to jnp.concatenate (which XLA can fuse).
        return jnp.concatenate(x, axis=self.d)


if __name__ == "__main__":
    key = jax.random.PRNGKey(0)
    k1, k2, k3, k4, k5, k6, k7 = jax.random.split(key, 7)

    # --- Direct Pallas-kernel tests at small YOLOv8-neck-like shapes. ---
    x1 = jax.random.normal(k1, (2, 4, 16, 16), dtype=jnp.float32)
    x2 = jax.random.normal(k2, (2, 8, 16, 16), dtype=jnp.float32)
    x3 = jax.random.normal(k3, (2, 4, 16, 16), dtype=jnp.float32)
    out = jax.block_until_ready(concat_channels_pallas([x1, x2, x3]))
    ref = jnp.concatenate([x1, x2, x3], axis=1)
    assert out.shape == (2, 16, 16, 16), out.shape
    assert out.dtype == ref.dtype
    assert bool(jnp.array_equal(out, ref)), "mismatch vs jnp.concatenate (f32)"

    # bf16, batch=1 (common inference case), different C/H/W.
    y1 = jax.random.normal(k4, (1, 6, 8, 8), dtype=jnp.bfloat16)
    y2 = jax.random.normal(k5, (1, 10, 8, 8), dtype=jnp.bfloat16)
    out2 = jax.block_until_ready(concat_channels_pallas([y1, y2]))
    ref2 = jnp.concatenate([y1, y2], axis=1)
    assert out2.shape == (1, 16, 8, 8), out2.shape
    assert bool(jnp.array_equal(out2, ref2)), "mismatch vs jnp.concatenate (bf16)"

    # --- Module dispatch: a larger concat takes the Pallas path (with chunked
    #     DMAs); the small one falls back to jnp.concatenate. ---
    concat = Concat(dimension=1)
    z1 = jax.random.normal(k6, (2, 32, 32, 32), dtype=jnp.float32)  # 256 KiB
    z2 = jax.random.normal(k7, (2, 32, 32, 32), dtype=jnp.float32)  # 256 KiB
    out3 = jax.block_until_ready(concat([z1, z2]))
    ref3 = jnp.concatenate([z1, z2], axis=1)
    assert out3.shape == (2, 64, 32, 32), out3.shape
    assert bool(jnp.array_equal(out3, ref3)), "mismatch vs jnp.concatenate (large)"

    out4 = jax.block_until_ready(concat([x1, x2, x3]))  # small -> XLA fallback
    assert bool(jnp.array_equal(out4, ref)), "mismatch on small fallback path"

    # Single-input fast path.
    out5 = jax.block_until_ready(concat([x1]))
    assert bool(jnp.array_equal(out5, x1)), "single-input fast path mismatch"

    print("KERNEL_OK")
</pallas_src>

<mosaic_0001>
module attributes {stable_mosaic.version = 11 : i64} {
  func.func @_concat_dma_kernel(%arg0: memref<2x4x16x16xf32, #tpu.memory_space<any>>, %arg1: memref<2x8x16x16xf32, #tpu.memory_space<any>>, %arg2: memref<2x4x16x16xf32, #tpu.memory_space<any>>, %arg3: memref<2x16x16x16xf32, #tpu.memory_space<any>>, %arg4: memref<3x!tpu.dma_semaphore, #tpu.memory_space<semaphore_mem>>) attributes {dimension_semantics = [], scalar_prefetch = 0 : i64, scratch_operands = 1 : i64, tpu.core_type = #tpu.core_type<tc>} {
    %c0_i32 = arith.constant 0 : i32
    %c0_i32_0 = arith.constant 0 : i32
    %c0_i32_1 = arith.constant 0 : i32
    %c0_i32_2 = arith.constant 0 : i32
    %c0_i32_3 = arith.constant 0 : i32
    %0 = tpu.memref_slice %arg0[%c0_i32_0, %c0_i32_1, %c0_i32_2, %c0_i32_3] : memref<2x4x16x16xf32, #tpu.memory_space<any>> -> memref<2x4x16x16xf32, #tpu.memory_space<any>>
    %c0_i32_4 = arith.constant 0 : i32
    %c0_i32_5 = arith.constant 0 : i32
    %c0_i32_6 = arith.constant 0 : i32
    %c0_i32_7 = arith.constant 0 : i32
    %1 = tpu.memref_slice %arg3[%c0_i32_4, %c0_i32_5, %c0_i32_6, %c0_i32_7] : memref<2x16x16x16xf32, #tpu.memory_space<any>> -> memref<2x4x16x16xf32, #tpu.memory_space<any>>
    %2 = tpu.memref_slice %arg4[%c0_i32] : memref<3x!tpu.dma_semaphore, #tpu.memory_space<semaphore_mem>> -> memref<1x!tpu.dma_semaphore, #tpu.memory_space<semaphore_mem>>
    %3 = tpu.memref_squeeze %2 : memref<1x!tpu.dma_semaphore, #tpu.memory_space<semaphore_mem>> -> memref<!tpu.dma_semaphore, #tpu.memory_space<semaphore_mem>>
    tpu.enqueue_dma source(%0 : memref<2x4x16x16xf32, #tpu.memory_space<any>>) target(%1 : memref<2x4x16x16xf32, #tpu.memory_space<any>>) target_semaphore(%3 : memref<!tpu.dma_semaphore, #tpu.memory_space<semaphore_mem>>)
    %c1_i32 = arith.constant 1 : i32
    %c0_i32_8 = arith.constant 0 : i32
    %c0_i32_9 = arith.constant 0 : i32
    %c0_i32_10 = arith.constant 0 : i32
    %c0_i32_11 = arith.constant 0 : i32
    %4 = tpu.memref_slice %arg1[%c0_i32_8, %c0_i32_9, %c0_i32_10, %c0_i32_11] : memref<2x8x16x16xf32, #tpu.memory_space<any>> -> memref<2x8x16x16xf32, #tpu.memory_space<any>>
    %c0_i32_12 = arith.constant 0 : i32
    %c4_i32 = arith.constant 4 : i32
    %c0_i32_13 = arith.constant 0 : i32
    %c0_i32_14 = arith.constant 0 : i32
    %5 = tpu.memref_slice %arg3[%c0_i32_12, %c4_i32, %c0_i32_13, %c0_i32_14] : memref<2x16x16x16xf32, #tpu.memory_space<any>> -> memref<2x8x16x16xf32, #tpu.memory_space<any>>
    %6 = tpu.memref_slice %arg4[%c1_i32] : memref<3x!tpu.dma_semaphore, #tpu.memory_space<semaphore_mem>> -> memref<1x!tpu.dma_semaphore, #tpu.memory_space<semaphore_mem>>
    %7 = tpu.memref_squeeze %6 : memref<1x!tpu.dma_semaphore, #tpu.memory_space<semaphore_mem>> -> memref<!tpu.dma_semaphore, #tpu.memory_space<semaphore_mem>>
    tpu.enqueue_dma source(%4 : memref<2x8x16x16xf32, #tpu.memory_space<any>>) target(%5 : memref<2x8x16x16xf32, #tpu.memory_space<any>>) target_semaphore(%7 : memref<!tpu.dma_semaphore, #tpu.memory_space<semaphore_mem>>)
    %c2_i32 = arith.constant 2 : i32
    %c0_i32_15 = arith.constant 0 : i32
    %c0_i32_16 = arith.constant 0 : i32
    %c0_i32_17 = arith.constant 0 : i32
    %c0_i32_18 = arith.constant 0 : i32
    %8 = tpu.memref_slice %arg2[%c0_i32_15, %c0_i32_16, %c0_i32_17, %c0_i32_18] : memref<2x4x16x16xf32, #tpu.memory_space<any>> -> memref<2x4x16x16xf32, #tpu.memory_space<any>>
    %c0_i32_19 = arith.constant 0 : i32
    %c12_i32 = arith.constant 12 : i32
    %c0_i32_20 = arith.constant 0 : i32
    %c0_i32_21 = arith.constant 0 : i32
    %9 = tpu.memref_slice %arg3[%c0_i32_19, %c12_i32, %c0_i32_20, %c0_i32_21] : memref<2x16x16x16xf32, #tpu.memory_space<any>> -> memref<2x4x16x16xf32, #tpu.memory_space<any>>
    %10 = tpu.memref_slice %arg4[%c2_i32] : memref<3x!tpu.dma_semaphore, #tpu.memory_space<semaphore_mem>> -> memref<1x!tpu.dma_semaphore, #tpu.memory_space<semaphore_mem>>
    %11 = tpu.memref_squeeze %10 : memref<1x!tpu.dma_semaphore, #tpu.memory_space<semaphore_mem>> -> memref<!tpu.dma_semaphore, #tpu.memory_space<semaphore_mem>>
    tpu.enqueue_dma source(%8 : memref<2x4x16x16xf32, #tpu.memory_space<any>>) target(%9 : memref<2x4x16x16xf32, #tpu.memory_space<any>>) target_semaphore(%11 : memref<!tpu.dma_semaphore, #tpu.memory_space<semaphore_mem>>)
    %c0_i32_22 = arith.constant 0 : i32
    %c0_i32_23 = arith.constant 0 : i32
    %c0_i32_24 = arith.constant 0 : i32
    %c0_i32_25 = arith.constant 0 : i32
    %c0_i32_26 = arith.constant 0 : i32
    %12 = tpu.memref_slice %arg0[%c0_i32_23, %c0_i32_24, %c0_i32_25, %c0_i32_26] : memref<2x4x16x16xf32, #tpu.memory_space<any>> -> memref<2x4x16x16xf32, #tpu.memory_space<any>>
    %c0_i32_27 = arith.constant 0 : i32
    %c0_i32_28 = arith.constant 0 : i32
    %c0_i32_29 = arith.constant 0 : i32
    %c0_i32_30 = arith.constant 0 : i32
    %13 = tpu.memref_slice %arg3[%c0_i32_27, %c0_i32_28, %c0_i32_29, %c0_i32_30] : memref<2x16x16x16xf32, #tpu.memory_space<any>> -> memref<2x4x16x16xf32, #tpu.memory_space<any>>
    %14 = tpu.memref_slice %arg4[%c0_i32_22] : memref<3x!tpu.dma_semaphore, #tpu.memory_space<semaphore_mem>> -> memref<1x!tpu.dma_semaphore, #tpu.memory_space<semaphore_mem>>
    %15 = tpu.memref_squeeze %14 : memref<1x!tpu.dma_semaphore, #tpu.memory_space<semaphore_mem>> -> memref<!tpu.dma_semaphore, #tpu.memory_space<semaphore_mem>>
    tpu.wait_dma2 semaphore(%15 : memref<!tpu.dma_semaphore, #tpu.memory_space<semaphore_mem>>) src(%12 : memref<2x4x16x16xf32, #tpu.memory_space<any>>) dst(%13 : memref<2x4x16x16xf32, #tpu.memory_space<any>>)
    %c1_i32_31 = arith.constant 1 : i32
    %c0_i32_32 = arith.constant 0 : i32
    %c0_i32_33 = arith.constant 0 : i32
    %c0_i32_34 = arith.constant 0 : i32
    %c0_i32_35 = arith.constant 0 : i32
    %16 = tpu.memref_slice %arg1[%c0_i32_32, %c0_i32_33, %c0_i32_34, %c0_i32_35] : memref<2x8x16x16xf32, #tpu.memory_space<any>> -> memref<2x8x16x16xf32, #tpu.memory_space<any>>
    %c0_i32_36 = arith.constant 0 : i32
    %c4_i32_37 = arith.constant 4 : i32
    %c0_i32_38 = arith.constant 0 : i32
    %c0_i32_39 = arith.constant 0 : i32
    %17 = tpu.memref_slice %arg3[%c0_i32_36, %c4_i32_37, %c0_i32_38, %c0_i32_39] : memref<2x16x16x16xf32, #tpu.memory_space<any>> -> memref<2x8x16x16xf32, #tpu.memory_space<any>>
    %18 = tpu.memref_slice %arg4[%c1_i32_31] : memref<3x!tpu.dma_semaphore, #tpu.memory_space<semaphore_mem>> -> memref<1x!tpu.dma_semaphore, #tpu.memory_space<semaphore_mem>>
    %19 = tpu.memref_squeeze %18 : memref<1x!tpu.dma_semaphore, #tpu.memory_space<semaphore_mem>> -> memref<!tpu.dma_semaphore, #tpu.memory_space<semaphore_mem>>
    tpu.wait_dma2 semaphore(%19 : memref<!tpu.dma_semaphore, #tpu.memory_space<semaphore_mem>>) src(%16 : memref<2x8x16x16xf32, #tpu.memory_space<any>>) dst(%17 : memref<2x8x16x16xf32, #tpu.memory_space<any>>)
    %c2_i32_40 = arith.constant 2 : i32
    %c0_i32_41 = arith.constant 0 : i32
    %c0_i32_42 = arith.constant 0 : i32
    %c0_i32_43 = arith.constant 0 : i32
    %c0_i32_44 = arith.constant 0 : i32
    %20 = tpu.memref_slice %arg2[%c0_i32_41, %c0_i32_42, %c0_i32_43, %c0_i32_44] : memref<2x4x16x16xf32, #tpu.memory_space<any>> -> memref<2x4x16x16xf32, #tpu.memory_space<any>>
    %c0_i32_45 = arith.constant 0 : i32
    %c12_i32_46 = arith.constant 12 : i32
    %c0_i32_47 = arith.constant 0 : i32
    %c0_i32_48 = arith.constant 0 : i32
    %21 = tpu.memref_slice %arg3[%c0_i32_45, %c12_i32_46, %c0_i32_47, %c0_i32_48] : memref<2x16x16x16xf32, #tpu.memory_space<any>> -> memref<2x4x16x16xf32, #tpu.memory_space<any>>
    %22 = tpu.memref_slice %arg4[%c2_i32_40] : memref<3x!tpu.dma_semaphore, #tpu.memory_space<semaphore_mem>> -> memref<1x!tpu.dma_semaphore, #tpu.memory_space<semaphore_mem>>
    %23 = tpu.memref_squeeze %22 : memref<1x!tpu.dma_semaphore, #tpu.memory_space<semaphore_mem>> -> memref<!tpu.dma_semaphore, #tpu.memory_space<semaphore_mem>>
    tpu.wait_dma2 semaphore(%23 : memref<!tpu.dma_semaphore, #tpu.memory_space<semaphore_mem>>) src(%20 : memref<2x4x16x16xf32, #tpu.memory_space<any>>) dst(%21 : memref<2x4x16x16xf32, #tpu.memory_space<any>>)
    return
  }
}

</mosaic_0001>

<llo_original>
// kernel: tpu_custom_call.1
$region0: #{tpu_custom_call.1}
  #allocation0 [shape = 'u32[]', space=smem, size = 0x4, offset = 0x4, fixed_abs, tag = 'smem constant byte address 0x4 - core index']
  #allocation1 [shape = 'u32[144,128]{1,0:T(1,128)}', space=vmem, size = 0x12000, scoped, tag = 'internal scratch']
  #allocation2 [shape = 's32[3]{0}', space=sflag, size = 0xc, scoped, tag = 'scratch operand']
  #allocation3 [shape = 's32[]', space=sflag, size = 0x4, offset = 0, fixed_abs, tag = 'sflag constant byte address 0x0 - dummy sync flag']
  #allocation5 [shape = 's32[]', space=sflag, size = 0x4, offset = 0, fixed_abs, tag = 'sflag constant byte address 0x0 - dummy sync flag']
  #allocation7 [shape = 's32[]', space=sflag, size = 0x4, offset = 0, fixed_abs, tag = 'sflag constant byte address 0x0 - dummy sync flag']
  %s0 = inlined_call_operand.hbm [shape: f32[2,4,16,16], index: 0, kind: input, shape index: {}]
  %s1 = inlined_call_operand.hbm [shape: f32[2,8,16,16], index: 1, kind: input, shape index: {}]
  %s2 = inlined_call_operand.hbm [shape: f32[2,4,16,16], index: 2, kind: input, shape index: {}]
  %s3 = inlined_call_operand.hbm [shape: f32[2,16,16,16], index: 3, kind: output, shape index: {}]
  %s4 = sld [smem:[#allocation0]]
  $region2: #{tpu_custom_call.1} parent=0
    _
  %s6 = ssub.s32 1, %s4
  %s7 = scalar_select 0, %s6, %s4
  $region1: #{tpu_custom_call.1} parent=0
    #allocation4 [shape = 'u32[3]{0}', space=smem, size = 0xc, scoped, tag = 'DMA stride descriptor']
    #allocation6 [shape = 'u32[3]{0}', space=smem, size = 0xc, scoped, tag = 'DMA stride descriptor']
    #allocation8 [shape = 'u32[3]{0}', space=smem, size = 0xc, scoped, tag = 'DMA stride descriptor']
    %s9 = sshll.u32 1, 14
    %s10 = sxor.u32 4294967295, %s9
    %s13 = sshll.u32 3, 24
    %s14 = sxor.u32 4294967295, %s13
    %s15 = sand.u32 0, %s14
    %s17 = sor.u32 %s15, 0
    %20 = sst [smem:[#allocation4]] 1024
    %s21 = scalar_lea.smem [#allocation4], 1
    %22 = sst [smem:[%s21]] 4096
    %s23 = scalar_lea.smem [#allocation4], 2
    %24 = sst [smem:[%s23]] 64
    %26 = dma.general %s0, 2048, %s3, [#allocation2], [#allocation3], [#allocation4], %s17, 0
    %s27 = scalar_lea.hbm %s3, 1024
    %s28 = scalar_lea.sflag [#allocation2], 1
    %s30 = sshll.u32 1, 14
    %s31 = sxor.u32 4294967295, %s30
    %s34 = sshll.u32 3, 24
    %s35 = sxor.u32 4294967295, %s34
    %s36 = sand.u32 0, %s35
    %s38 = sor.u32 %s36, 0
    %41 = sst [smem:[#allocation6]] 2048
    %s42 = scalar_lea.smem [#allocation6], 1
    %43 = sst [smem:[%s42]] 4096
    %s44 = scalar_lea.smem [#allocation6], 2
    %45 = sst [smem:[%s44]] 128
    %47 = dma.general %s1, 4096, %s27, %s28, [#allocation5], [#allocation6], %s38, 0
    %s48 = scalar_lea.hbm %s3, 3072
    %s49 = scalar_lea.sflag [#allocation2], 2
    %s51 = sshll.u32 1, 14
    %s52 = sxor.u32 4294967295, %s51
    %s55 = sshll.u32 3, 24
    %s56 = sxor.u32 4294967295, %s55
    %s57 = sand.u32 0, %s56
    %s59 = sor.u32 %s57, 0
    %62 = sst [smem:[#allocation8]] 1024
    %s63 = scalar_lea.smem [#allocation8], 1
    %64 = sst [smem:[%s63]] 4096
    %s65 = scalar_lea.smem [#allocation8], 2
    %66 = sst [smem:[%s65]] 64
    %68 = dma.general %s2, 2048, %s48, %s49, [#allocation7], [#allocation8], %s59, 0
    %s69 = smul.u32 2, 4
    %s70 = smul.u32 %s69, 16
    %s71 = smul.u32 %s70, 1
    %s72 = sshll.u32 %s71, 4
    %73 = dma.done [#allocation2], %s72
    %s74 = smul.u32 2, 8
    %s75 = smul.u32 %s74, 16
    %s76 = smul.u32 %s75, 1
    %s77 = sshll.u32 %s76, 4
    %78 = dma.done %s28, %s77
    %s79 = sshll.u32 %s71, 4
    %80 = dma.done %s49, %s79
  %81 = vsyncmov [#allocation2]
  %s82 = vpop.sfrf %81
  %p83 = scmp.eq.s32.totalorder %s82, 0
  %p84 = pneg %p83
  %86 = shalt.err (%p84)
  %s87 = scalar_lea.sflag [#allocation2], 1
  %88 = vsyncmov %s87
  %s89 = vpop.sfrf %88
  %p90 = scmp.eq.s32.totalorder %s89, 0
  %p91 = pneg %p90
  %93 = shalt.err (%p91)
  %s94 = scalar_lea.sflag [#allocation2], 2
  %95 = vsyncmov %s94
  %s96 = vpop.sfrf %95
  %p97 = scmp.eq.s32.totalorder %s96, 0
  %p98 = pneg %p97
  %100 = shalt.err (%p98)

</llo_original>
